<compile_context>
chip_gen: v6e
topology: v6e:2x2x1
jax: 0.10.0
libtpu: 0.0.40
codegen_flags: <defaults>
</compile_context>

<pallas_src>
import functools

import jax
import jax.numpy as jnp
import numpy as np
from jax.experimental import pallas as pl
from jax.experimental.pallas import tpu as pltpu


def _round_up(x, m):
    return (x + m - 1) // m * m


def _pad2d(x, rows, cols):
    r, c = x.shape
    if r == rows and c == cols:
        return x
    return jnp.pad(x, ((0, rows - r), (0, cols - c)))


def _tpu_vmem_capacity_bytes():
    """Per-core VMEM capacity; conservative (v7x) default if the query fails."""
    try:
        info = pltpu.get_tpu_info()
        for name in ("vmem_capacity_bytes", "vmem_size_bytes", "vmem_bytes"):
            val = getattr(info, name, None)
            if val:
                return int(val)
    except Exception:
        pass
    return 64 * 1024 * 1024


_SEM_CACHE = []


def _dim_semantics_candidates():
    """Prefer CORE_PARALLEL (shards the batch grid across v7x's two TCs);
    fall back to plain "parallel" if the backend rejects it."""
    if _SEM_CACHE:
        return list(_SEM_CACHE)
    cands = []
    core_parallel = getattr(pltpu, "CORE_PARALLEL", None)
    if core_parallel is not None:
        cands.append(core_parallel)
    cands.append("parallel")
    return cands


def _ls_encoder_kernel(h_ref, w_ref, b_ref, eps_ref, loc_ref, scale_ref, z_ref,
                       *, z_dim, z_pad):
    """One batch tile: fused (loc | scale-pre) matmul, softplus, rsample."""
    h = h_ref[...].astype(w_ref.dtype)                         # (TB, D)
    # Single wide MXU call for both heads, f32 accumulation.
    pre = jnp.dot(h, w_ref[...], preferred_element_type=jnp.float32)
    pre = pre + b_ref[...]                                     # (TB, 2*Zp)
    loc_w = pre[:, :z_pad]                                     # tile-aligned slice
    raw_w = pre[:, z_pad:]
    # PyTorch Softplus (beta=1, threshold=20).  exp() overflow in the dead
    # branch is discarded by the select (no NaN), so no clamp is needed.
    scale_w = jnp.where(raw_w > 20.0, raw_w, jnp.log1p(jnp.exp(raw_w)))
    scale_w = scale_w + jnp.float32(1e-7)
    # Narrow to the true z width just before the (masked) stores; HBM traffic
    # is Z-wide, not Zp-wide.
    loc = loc_w[:, :z_dim]                                     # (TB, Z)
    scale = scale_w[:, :z_dim]
    z = loc + scale * eps_ref[...]
    loc_ref[...] = loc
    scale_ref[...] = scale
    z_ref[...] = z


def ls_encoder_linear(hidden, w_loc, b_loc, w_scale, b_scale, eps, *,
                      block_b=2048, compute_dtype=jnp.bfloat16):
    """hidden: (B, D); w_*: (D, Z) (transpose of the torch Linear weight);
    b_*: (1, Z) or (Z,); eps: (B, Z).  Returns ((loc, scale), z).

    Note: compute_dtype=bfloat16 (default) feeds the MXU in bf16 with f32
    accumulation; pass jnp.float32 for exact torch-Linear parity."""
    B, D = hidden.shape
    Z = w_loc.shape[1]
    if Z == 0:  # nn.Sequential allows z_dim == 0
        empty = jnp.zeros((B, 0), jnp.float32)
        return (empty, empty), empty
    Zp = _round_up(Z, 128)                    # lane-dense per-head matmul width

    # Fuse + lane-pad the two heads once (wrapper-side, reused across tiles).
    w_cat = jnp.concatenate(
        [_pad2d(w_loc, D, Zp), _pad2d(w_scale, D, Zp)], axis=1
    ).astype(compute_dtype)                                     # (D, 2*Zp)
    b_cat = jnp.concatenate(
        [_pad2d(b_loc.reshape(1, Z), 1, Zp),
         _pad2d(b_scale.reshape(1, Z), 1, Zp)], axis=1
    ).astype(jnp.float32)                                       # (1, 2*Zp)

    eps = eps.astype(jnp.float32)
    # TODO(synk): eps could instead be generated in-kernel (pltpu.prng_seed +
    # pltpu.stateful_normal) to drop this input stream entirely.

    # --- batch-tile sizing against a per-generation VMEM budget ------------
    in_itemsize = jnp.dtype(hidden.dtype).itemsize
    cd_itemsize = jnp.dtype(compute_dtype).itemsize
    capacity = _tpu_vmem_capacity_bytes()
    budget = (capacity * 3) // 8              # ~24 MiB on v7x, ~48 MiB on v5e/v6e
    # Streamed bytes per batch row (double-buffered) + in-kernel f32 temporaries.
    per_row = 2 * (D * in_itemsize + 4 * Z * 4) + 6 * Zp * 4
    # Grid-invariant weight/bias, counted at two buffers (conservative).
    resident = 2 * (D * 2 * Zp * cd_itemsize + 2 * Zp * 4)

    tb = _round_up(min(max(block_b, 8), _round_up(B, 8)), 8)
    avail = budget - resident
    if avail >= 8 * per_row:
        tb = min(tb, max((avail // per_row) // 8 * 8, 8))
    else:
        # TODO(synk): for very large D the resident weight exceeds the budget;
        # a K grid axis ("arbitrary", f32 accumulator) would keep tb large.
        tb = 8

    grid = (pl.cdiv(B, tb),)                  # ragged last tile handled by Pallas
    need = resident + per_row * tb
    vmem_limit = int(min(max(need + (16 << 20), 32 << 20), capacity - (16 << 20)))

    out_sds = jax.ShapeDtypeStruct((B, Z), jnp.float32)
    kern = functools.partial(_ls_encoder_kernel, z_dim=Z, z_pad=Zp)

    def _call(dim_sem):
        return pl.pallas_call(
            kern,
            out_shape=(out_sds, out_sds, out_sds),
            grid=grid,
            in_specs=[
                pl.BlockSpec((tb, D), lambda i: (i, 0)),        # hidden tile
                pl.BlockSpec((D, 2 * Zp), lambda i: (0, 0)),    # fused weight (resident)
                pl.BlockSpec((1, 2 * Zp), lambda i: (0, 0)),    # fused bias   (resident)
                pl.BlockSpec((tb, Z), lambda i: (i, 0)),        # eps tile (true width)
            ],
            out_specs=(pl.BlockSpec((tb, Z), lambda i: (i, 0)),
                       pl.BlockSpec((tb, Z), lambda i: (i, 0)),
                       pl.BlockSpec((tb, Z), lambda i: (i, 0))),
            compiler_params=pltpu.CompilerParams(
                dimension_semantics=(dim_sem,),
                vmem_limit_bytes=vmem_limit,
            ),
        )(hidden, w_cat, b_cat, eps)

    outs, last_err = None, None
    for sem in _dim_semantics_candidates():
        try:
            outs = jax.block_until_ready(_call(sem))
            _SEM_CACHE[:] = [sem]
            break
        except Exception as e:                # e.g. CORE_PARALLEL unsupported here
            last_err = e
            outs = None
    if outs is None:
        raise last_err

    loc, scale, z = outs
    # TODO(synk): torch.distributions.Normal has no Pallas equivalent; the
    # distribution is represented by its (loc, scale) parameters.
    return (loc, scale), z


def _xavier_uniform(key, fan_in, fan_out):
    # matches torch.nn.init.xavier_uniform_ for a Linear weight
    bound = jnp.sqrt(6.0 / (fan_in + fan_out))
    # stored as (fan_in, fan_out) == transpose of the torch Linear weight
    return jax.random.uniform(key, (fan_in, fan_out), jnp.float32,
                              minval=-bound, maxval=bound)


def _reference(hidden, w_loc, b_loc, w_scale, b_scale, eps, cast_bf16):
    """float64 host reference (optionally emulating bf16 matmul inputs)."""
    def f64(x, cast=False):
        if cast:
            x = x.astype(jnp.bfloat16)
        return np.asarray(x).astype(np.float64)

    h = f64(hidden, cast_bf16)
    wl = f64(w_loc, cast_bf16)
    ws = f64(w_scale, cast_bf16)
    bl, bs, e = f64(b_loc), f64(b_scale), f64(eps)
    loc = h @ wl + bl
    pre = h @ ws + bs
    sp = np.where(pre > 20.0, pre, np.log1p(np.exp(np.minimum(pre, 20.0))))
    scale = sp + 1e-7
    return loc, scale, loc + scale * e


if __name__ == "__main__":
    key = jax.random.PRNGKey(0)
    k_h, k_wl, k_ws, k_eps = jax.random.split(key, 4)

    B, dim_input, z_dim = 48, 32, 16

    hidden = jax.random.normal(k_h, (B, dim_input), jnp.float32)
    w_loc = _xavier_uniform(k_wl, dim_input, z_dim)
    b_loc = jnp.zeros((1, z_dim), jnp.float32)
    w_scale = _xavier_uniform(k_ws, dim_input, z_dim)
    b_scale = jnp.zeros((1, z_dim), jnp.float32)
    eps = jax.random.normal(k_eps, (B, z_dim), jnp.float32)

    # 1) f32 MXU path, small batch tile -> multi-step grid with a ragged last tile.
    (loc32, scale32), z32 = ls_encoder_linear(
        hidden, w_loc, b_loc, w_scale, b_scale, eps,
        block_b=32, compute_dtype=jnp.float32)
    jax.block_until_ready((loc32, scale32, z32))
    assert loc32.shape == (B, z_dim) and scale32.shape == (B, z_dim)
    assert z32.shape == (B, z_dim)
    rl, rs, rz = _reference(hidden, w_loc, b_loc, w_scale, b_scale, eps, False)
    assert np.allclose(np.asarray(loc32), rl, atol=1e-4)
    assert np.allclose(np.asarray(scale32), rs, atol=1e-4)
    assert np.allclose(np.asarray(z32), rz, atol=1e-4)

    # 2) default bf16 MXU path (f32 accumulation), single grid step.
    (locb, scaleb), zb = ls_encoder_linear(
        hidden, w_loc, b_loc, w_scale, b_scale, eps)
    jax.block_until_ready((locb, scaleb, zb))
    rlb, rsb, rzb = _reference(hidden, w_loc, b_loc, w_scale, b_scale, eps, True)
    assert np.allclose(np.asarray(locb), rlb, atol=2e-3)
    assert np.allclose(np.asarray(scaleb), rsb, atol=2e-3)
    assert np.allclose(np.asarray(zb), rzb, atol=2e-3)
    assert bool(np.all(np.asarray(scaleb) > 0.0))

    print("KERNEL_OK")
</pallas_src>

<mosaic_0001>
module attributes {stable_mosaic.version = 11 : i64} {
  func.func @_ls_encoder_kernel(%arg0: i32, %arg1: memref<32x32xf32, #tpu.memory_space<vmem>>, %arg2: memref<32x256xf32, #tpu.memory_space<vmem>>, %arg3: memref<1x256xf32, #tpu.memory_space<vmem>>, %arg4: memref<32x16xf32, #tpu.memory_space<vmem>>, %arg5: memref<32x16xf32, #tpu.memory_space<vmem>>, %arg6: memref<32x16xf32, #tpu.memory_space<vmem>>, %arg7: memref<32x16xf32, #tpu.memory_space<vmem>>) attributes {dimension_semantics = [#tpu.dimension_semantics<core_parallel>], iteration_bounds = array<i64: 2>, scalar_prefetch = 0 : i64, scratch_operands = 0 : i64, tpu.core_type = #tpu.core_type<tc>, window_params = [{transform_indices = @transform_0, window_bounds = array<i64: 32, 32>}, {pipeline_mode = #tpu.pipeline_mode<synchronous>, transform_indices = @transform_1, window_bounds = array<i64: 32, 256>}, {pipeline_mode = #tpu.pipeline_mode<synchronous>, transform_indices = @transform_2, window_bounds = array<i64: 1, 256>}, {transform_indices = @transform_3, window_bounds = array<i64: 32, 16>}, {transform_indices = @transform_4, window_bounds = array<i64: 32, 16>}, {transform_indices = @transform_5, window_bounds = array<i64: 32, 16>}, {transform_indices = @transform_6, window_bounds = array<i64: 32, 16>}]} {
    %c0 = arith.constant 0 : index
    %c0_0 = arith.constant 0 : index
    %0 = vector.load %arg1[%c0, %c0_0] : memref<32x32xf32, #tpu.memory_space<vmem>>, vector<32x32xf32>
    %c0_1 = arith.constant 0 : index
    %c0_2 = arith.constant 0 : index
    %1 = vector.load %arg2[%c0_1, %c0_2] : memref<32x256xf32, #tpu.memory_space<vmem>>, vector<32x256xf32>
    %cst = arith.constant dense<0.000000e+00> : vector<32x256xf32>
    %2 = tpu.matmul %0, %1, %cst {dimension_numbers = #tpu.dot_dimension_numbers<[1], [0], [0], [1], [0, 0, 1, 1], [], []>} : vector<32x32xf32>, vector<32x256xf32>, vector<32x256xf32> -> vector<32x256xf32>
    %c0_3 = arith.constant 0 : index
    %c0_4 = arith.constant 0 : index
    %3 = vector.load %arg3[%c0_3, %c0_4] : memref<1x256xf32, #tpu.memory_space<vmem>>, vector<1x256xf32>
    %4 = vector.broadcast %3 : vector<1x256xf32> to vector<32x256xf32>
    %5 = arith.addf %2, %4 : vector<32x256xf32>
    %6 = vector.extract_strided_slice %5 {offsets = [0, 0], sizes = [32, 128], strides = [1, 1]} : vector<32x256xf32> to vector<32x128xf32>
    %7 = vector.extract_strided_slice %5 {offsets = [0, 128], sizes = [32, 128], strides = [1, 1]} : vector<32x256xf32> to vector<32x128xf32>
    %cst_5 = arith.constant 2.000000e+01 : f32
    %8 = vector.broadcast %cst_5 : f32 to vector<32x128xf32>
    %9 = arith.cmpf ogt, %7, %8 : vector<32x128xf32>
    %10 = math.exp %7 : vector<32x128xf32>
    %11 = math.log1p %10 : vector<32x128xf32>
    %12 = arith.select %9, %7, %11 : vector<32x128xi1>, vector<32x128xf32>
    %cst_6 = arith.constant 1.000000e-07 : f32
    %13 = vector.broadcast %cst_6 : f32 to vector<32x128xf32>
    %14 = arith.addf %12, %13 : vector<32x128xf32>
    %15 = vector.extract_strided_slice %6 {offsets = [0, 0], sizes = [32, 16], strides = [1, 1]} : vector<32x128xf32> to vector<32x16xf32>
    %16 = vector.extract_strided_slice %14 {offsets = [0, 0], sizes = [32, 16], strides = [1, 1]} : vector<32x128xf32> to vector<32x16xf32>
    %c0_7 = arith.constant 0 : index
    %c0_8 = arith.constant 0 : index
    %17 = vector.load %arg4[%c0_7, %c0_8] : memref<32x16xf32, #tpu.memory_space<vmem>>, vector<32x16xf32>
    %18 = arith.mulf %16, %17 : vector<32x16xf32>
    %19 = arith.addf %15, %18 : vector<32x16xf32>
    %c0_9 = arith.constant 0 : index
    %c0_10 = arith.constant 0 : index
    %20 = vector.load %arg5[%c0_9, %c0_10] : memref<32x16xf32, #tpu.memory_space<vmem>>, vector<32x16xf32>
    tpu.vector_store %arg5[%c0_9, %c0_10], %15 {strides = array<i32>} : memref<32x16xf32, #tpu.memory_space<vmem>>, vector<32x16xf32>,
    %c0_11 = arith.constant 0 : index
    %c0_12 = arith.constant 0 : index
    %21 = vector.load %arg6[%c0_11, %c0_12] : memref<32x16xf32, #tpu.memory_space<vmem>>, vector<32x16xf32>
    tpu.vector_store %arg6[%c0_11, %c0_12], %16 {strides = array<i32>} : memref<32x16xf32, #tpu.memory_space<vmem>>, vector<32x16xf32>,
    %c0_13 = arith.constant 0 : index
    %c0_14 = arith.constant 0 : index
    %22 = vector.load %arg7[%c0_13, %c0_14] : memref<32x16xf32, #tpu.memory_space<vmem>>, vector<32x16xf32>
    tpu.vector_store %arg7[%c0_13, %c0_14], %19 {strides = array<i32>} : memref<32x16xf32, #tpu.memory_space<vmem>>, vector<32x16xf32>,
    return
  }
  func.func @transform_0(%arg0: i32) -> (i32, i32) {
    %c0_i32 = arith.constant 0 : i32
    %c0_i32_0 = arith.constant 0 : i32
    return %arg0, %c0_i32 : i32, i32
  }
  func.func @transform_1(%arg0: i32) -> (i32, i32) {
    %c0_i32 = arith.constant 0 : i32
    %c0_i32_0 = arith.constant 0 : i32
    %c0_i32_1 = arith.constant 0 : i32
    return %c0_i32, %c0_i32_0 : i32, i32
  }
  func.func @transform_2(%arg0: i32) -> (i32, i32) {
    %c0_i32 = arith.constant 0 : i32
    %c0_i32_0 = arith.constant 0 : i32
    %c0_i32_1 = arith.constant 0 : i32
    return %c0_i32, %c0_i32_0 : i32, i32
  }
  func.func @transform_3(%arg0: i32) -> (i32, i32) {
    %c0_i32 = arith.constant 0 : i32
    %c0_i32_0 = arith.constant 0 : i32
    return %arg0, %c0_i32 : i32, i32
  }
  func.func @transform_4(%arg0: i32) -> (i32, i32) {
    %c0_i32 = arith.constant 0 : i32
    %c0_i32_0 = arith.constant 0 : i32
    return %arg0, %c0_i32 : i32, i32
  }
  func.func @transform_5(%arg0: i32) -> (i32, i32) {
    %c0_i32 = arith.constant 0 : i32
    %c0_i32_0 = arith.constant 0 : i32
    return %arg0, %c0_i32 : i32, i32
  }
  func.func @transform_6(%arg0: i32) -> (i32, i32) {
    %c0_i32 = arith.constant 0 : i32
    %c0_i32_0 = arith.constant 0 : i32
    return %arg0, %c0_i32 : i32, i32
  }
}

module attributes {stable_mosaic.version = 11 : i64} {
  func.func @_ls_encoder_kernel(%arg0: i32, %arg1: memref<32x32xf32, #tpu.memory_space<vmem>>, %arg2: memref<32x256xf32, #tpu.memory_space<vmem>>, %arg3: memref<1x256xf32, #tpu.memory_space<vmem>>, %arg4: memref<32x16xf32, #tpu.memory_space<vmem>>, %arg5: memref<32x16xf32, #tpu.memory_space<vmem>>, %arg6: memref<32x16xf32, #tpu.memory_space<vmem>>, %arg7: memref<32x16xf32, #tpu.memory_space<vmem>>) attributes {dimension_semantics = [#tpu.dimension_semantics<parallel>], iteration_bounds = array<i64: 2>, scalar_prefetch = 0 : i64, scratch_operands = 0 : i64, tpu.core_type = #tpu.core_type<tc>, window_params = [{transform_indices = @transform_0, window_bounds = array<i64: 32, 32>}, {pipeline_mode = #tpu.pipeline_mode<synchronous>, transform_indices = @transform_1, window_bounds = array<i64: 32, 256>}, {pipeline_mode = #tpu.pipeline_mode<synchronous>, transform_indices = @transform_2, window_bounds = array<i64: 1, 256>}, {transform_indices = @transform_3, window_bounds = array<i64: 32, 16>}, {transform_indices = @transform_4, window_bounds = array<i64: 32, 16>}, {transform_indices = @transform_5, window_bounds = array<i64: 32, 16>}, {transform_indices = @transform_6, window_bounds = array<i64: 32, 16>}]} {
    %c0 = arith.constant 0 : index
    %c0_0 = arith.constant 0 : index
    %0 = vector.load %arg1[%c0, %c0_0] : memref<32x32xf32, #tpu.memory_space<vmem>>, vector<32x32xf32>
    %c0_1 = arith.constant 0 : index
    %c0_2 = arith.constant 0 : index
    %1 = vector.load %arg2[%c0_1, %c0_2] : memref<32x256xf32, #tpu.memory_space<vmem>>, vector<32x256xf32>
    %cst = arith.constant dense<0.000000e+00> : vector<32x256xf32>
    %2 = tpu.matmul %0, %1, %cst {dimension_numbers = #tpu.dot_dimension_numbers<[1], [0], [0], [1], [0, 0, 1, 1], [], []>} : vector<32x32xf32>, vector<32x256xf32>, vector<32x256xf32> -> vector<32x256xf32>
    %c0_3 = arith.constant 0 : index
    %c0_4 = arith.constant 0 : index
    %3 = vector.load %arg3[%c0_3, %c0_4] : memref<1x256xf32, #tpu.memory_space<vmem>>, vector<1x256xf32>
    %4 = vector.broadcast %3 : vector<1x256xf32> to vector<32x256xf32>
    %5 = arith.addf %2, %4 : vector<32x256xf32>
    %6 = vector.extract_strided_slice %5 {offsets = [0, 0], sizes = [32, 128], strides = [1, 1]} : vector<32x256xf32> to vector<32x128xf32>
    %7 = vector.extract_strided_slice %5 {offsets = [0, 128], sizes = [32, 128], strides = [1, 1]} : vector<32x256xf32> to vector<32x128xf32>
    %cst_5 = arith.constant 2.000000e+01 : f32
    %8 = vector.broadcast %cst_5 : f32 to vector<32x128xf32>
    %9 = arith.cmpf ogt, %7, %8 : vector<32x128xf32>
    %10 = math.exp %7 : vector<32x128xf32>
    %11 = math.log1p %10 : vector<32x128xf32>
    %12 = arith.select %9, %7, %11 : vector<32x128xi1>, vector<32x128xf32>
    %cst_6 = arith.constant 1.000000e-07 : f32
    %13 = vector.broadcast %cst_6 : f32 to vector<32x128xf32>
    %14 = arith.addf %12, %13 : vector<32x128xf32>
    %15 = vector.extract_strided_slice %6 {offsets = [0, 0], sizes = [32, 16], strides = [1, 1]} : vector<32x128xf32> to vector<32x16xf32>
    %16 = vector.extract_strided_slice %14 {offsets = [0, 0], sizes = [32, 16], strides = [1, 1]} : vector<32x128xf32> to vector<32x16xf32>
    %c0_7 = arith.constant 0 : index
    %c0_8 = arith.constant 0 : index
    %17 = vector.load %arg4[%c0_7, %c0_8] : memref<32x16xf32, #tpu.memory_space<vmem>>, vector<32x16xf32>
    %18 = arith.mulf %16, %17 : vector<32x16xf32>
    %19 = arith.addf %15, %18 : vector<32x16xf32>
    %c0_9 = arith.constant 0 : index
    %c0_10 = arith.constant 0 : index
    %20 = vector.load %arg5[%c0_9, %c0_10] : memref<32x16xf32, #tpu.memory_space<vmem>>, vector<32x16xf32>
    tpu.vector_store %arg5[%c0_9, %c0_10], %15 {strides = array<i32>} : memref<32x16xf32, #tpu.memory_space<vmem>>, vector<32x16xf32>,
    %c0_11 = arith.constant 0 : index
    %c0_12 = arith.constant 0 : index
    %21 = vector.load %arg6[%c0_11, %c0_12] : memref<32x16xf32, #tpu.memory_space<vmem>>, vector<32x16xf32>
    tpu.vector_store %arg6[%c0_11, %c0_12], %16 {strides = array<i32>} : memref<32x16xf32, #tpu.memory_space<vmem>>, vector<32x16xf32>,
    %c0_13 = arith.constant 0 : index
    %c0_14 = arith.constant 0 : index
    %22 = vector.load %arg7[%c0_13, %c0_14] : memref<32x16xf32, #tpu.memory_space<vmem>>, vector<32x16xf32>
    tpu.vector_store %arg7[%c0_13, %c0_14], %19 {strides = array<i32>} : memref<32x16xf32, #tpu.memory_space<vmem>>, vector<32x16xf32>,
    return
  }
  func.func @transform_0(%arg0: i32) -> (i32, i32) {
    %c0_i32 = arith.constant 0 : i32
    %c0_i32_0 = arith.constant 0 : i32
    return %arg0, %c0_i32 : i32, i32
  }
  func.func @transform_1(%arg0: i32) -> (i32, i32) {
    %c0_i32 = arith.constant 0 : i32
    %c0_i32_0 = arith.constant 0 : i32
    %c0_i32_1 = arith.constant 0 : i32
    return %c0_i32, %c0_i32_0 : i32, i32
  }
  func.func @transform_2(%arg0: i32) -> (i32, i32) {
    %c0_i32 = arith.constant 0 : i32
    %c0_i32_0 = arith.constant 0 : i32
    %c0_i32_1 = arith.constant 0 : i32
    return %c0_i32, %c0_i32_0 : i32, i32
  }
  func.func @transform_3(%arg0: i32) -> (i32, i32) {
    %c0_i32 = arith.constant 0 : i32
    %c0_i32_0 = arith.constant 0 : i32
    return %arg0, %c0_i32 : i32, i32
  }
  func.func @transform_4(%arg0: i32) -> (i32, i32) {
    %c0_i32 = arith.constant 0 : i32
    %c0_i32_0 = arith.constant 0 : i32
    return %arg0, %c0_i32 : i32, i32
  }
  func.func @transform_5(%arg0: i32) -> (i32, i32) {
    %c0_i32 = arith.constant 0 : i32
    %c0_i32_0 = arith.constant 0 : i32
    return %arg0, %c0_i32 : i32, i32
  }
  func.func @transform_6(%arg0: i32) -> (i32, i32) {
    %c0_i32 = arith.constant 0 : i32
    %c0_i32_0 = arith.constant 0 : i32
    return %arg0, %c0_i32 : i32, i32
  }
}

</mosaic_0001>

<llo_original>
// kernel: tpu_custom_call.1
$region0: #{tpu_custom_call.1}
  #allocation0 [shape = 'u32[]', space=smem, size = 0x4, offset = 0x4, fixed_abs, tag = 'smem constant byte address 0x4 - core index']
  #allocation1 [shape = 'u32[144,128]{1,0:T(1,128)}', space=vmem, size = 0x12000, scoped, tag = 'internal scratch']
  %s0 = inlined_call_operand.vmem [shape: f32[48,32], index: 0, kind: input, shape index: {}]
  %s1 = inlined_call_operand.vmem [shape: f32[32,256], index: 1, kind: input, shape index: {}]
  %s2 = inlined_call_operand.vmem [shape: f32[1,256], index: 2, kind: input, shape index: {}]
  %s3 = inlined_call_operand.vmem [shape: f32[48,16], index: 3, kind: input, shape index: {}]
  %s4 = inlined_call_operand.vmem [shape: f32[48,16], index: 4, kind: output, shape index: {0}]
  %s5 = inlined_call_operand.vmem [shape: f32[48,16], index: 5, kind: output, shape index: {1}]
  %s6 = inlined_call_operand.vmem [shape: f32[48,16], index: 6, kind: output, shape index: {2}]
  %7 = xla_tuple %s4, %s5, %s6
  %s8 = sld [smem:[#allocation0]]
  $region209: #{tpu_custom_call.1} parent=0
    _
  %s10 = ssub.s32 1, %s8
  %s11 = scalar_select 0, %s10, %s8
  $region1: #{tpu_custom_call.1} parent=0
    #allocation2 [shape = 'u8[32768]{0}', space=vmem, size = 0x8000, scoped, tag = 'output window, operand 0']
    #allocation3 [shape = 'u8[32768]{0}', space=vmem, size = 0x8000, scoped, tag = 'output window, operand 1']
    #allocation4 [shape = 'u8[32768]{0}', space=vmem, size = 0x8000, scoped, tag = 'output window, operand 2']
    loop: start=0, step=1, limit=4
    $region2: #{tpu_custom_call.1} parent=1 // loop_pre_header
      _
    $region3: #{tpu_custom_call.1} parent=1 // loop_header
      %s13 = sphi 0, %s17
      %p14 = scmp.ge.s32.totalorder %s13, 4
      %s23 = sphi 0, %s25
      %s26 = sphi 0, %s23
      %s27 = sphi 0, %s26
      %s43 = sphi 0, %s27
      %s47 = sphi 0, %s47
      %s49 = sphi 0, %s47
      %s50 = sphi 0, %s49
      %s64 = sphi 0, %s50
      %s68 = sphi 0, %s68
      %s70 = sphi 0, %s68
      %s71 = sphi 0, %s70
      %s85 = sphi 0, %s71
      %s91 = sphi 0, %s93
      %s94 = sphi 0, %s91
      %s95 = sphi 0, %s94
      %s111 = sphi 0, %s95
      %s117 = sphi 0, %s119
      %s120 = sphi 0, %s117
      %s121 = sphi 0, %s120
      %s137 = sphi 0, %s121
      %s143 = sphi 0, %s145
      %s146 = sphi 0, %s143
      %s147 = sphi 0, %s146
      %s163 = sphi 0, %s147
      %s169 = sphi 0, %s171
      %s172 = sphi 0, %s169
      %s173 = sphi 0, %s172
      %s189 = sphi 0, %s173
    $region4: #{tpu_custom_call.1} parent=1 // loop_header_branch
      %16 = sbr.rel (%p14) target = $region8
    $region5: #{tpu_custom_call.1} parent=1 // loop_body
      %s18 = ssub.s32 %s13, 1
      %s19 = ssub.s32 %s13, 2
      %s20 = sadd.s32 %s13, 1
      %s21 = ssub.s32 %s13, %s20
      %p22 = scmp.eq.s32.totalorder %s21, 0
      %s24 = sadd.s32 %s23, 1
      %s25 = scalar_select %p22, %s23, %s24
      %p28 = pneg %p22
      %p29 = scmp.eq.s32.totalorder %s13, 1
      %p30 = por %p28, %p29
      %p31 = scmp.ne.s32.totalorder %s23, %s26
      %p32 = scmp.eq.s32.totalorder %s13, 0
      %p33 = por %p31, %p32
      %p34 = scmp.ne.s32.totalorder %s23, %s26
      %p35 = scmp.eq.s32.totalorder %s18, 1
      %p36 = por %p34, %p35
      %p37 = scmp.ne.s32.totalorder %s26, %s27
      %p38 = scmp.eq.s32.totalorder %s18, 0
      %p39 = por %p37, %p38
      %p40 = scmp.ne.s32.totalorder %s26, %s27
      %p41 = scmp.eq.s32.totalorder %s19, 1
      %p42 = por %p40, %p41
      %p44 = scmp.ne.s32.totalorder %s27, %s43
      %p45 = scmp.eq.s32.totalorder %s19, 0
      %p46 = por %p44, %p45
      %s48 = sadd.s32 %s47, 1
      %p51 = scmp.eq.s32.totalorder %s13, 1
      %p52 = scmp.ne.s32.totalorder %s47, %s49
      %p53 = scmp.eq.s32.totalorder %s13, 0
      %p54 = por %p52, %p53
      %p55 = scmp.ne.s32.totalorder %s47, %s49
      %p56 = scmp.eq.s32.totalorder %s18, 1
      %p57 = por %p55, %p56
      %p58 = scmp.ne.s32.totalorder %s49, %s50
      %p59 = scmp.eq.s32.totalorder %s18, 0
      %p60 = por %p58, %p59
      %p61 = scmp.ne.s32.totalorder %s49, %s50
      %p62 = scmp.eq.s32.totalorder %s19, 1
      %p63 = por %p61, %p62
      %p65 = scmp.ne.s32.totalorder %s50, %s64
      %p66 = scmp.eq.s32.totalorder %s19, 0
      %p67 = por %p65, %p66
      %s69 = sadd.s32 %s68, 1
      %p72 = scmp.eq.s32.totalorder %s13, 1
      %p73 = scmp.ne.s32.totalorder %s68, %s70
      %p74 = scmp.eq.s32.totalorder %s13, 0
      %p75 = por %p73, %p74
      %p76 = scmp.ne.s32.totalorder %s68, %s70
      %p77 = scmp.eq.s32.totalorder %s18, 1
      %p78 = por %p76, %p77
      %p79 = scmp.ne.s32.totalorder %s70, %s71
      %p80 = scmp.eq.s32.totalorder %s18, 0
      %p81 = por %p79, %p80
      %p82 = scmp.ne.s32.totalorder %s70, %s71
      %p83 = scmp.eq.s32.totalorder %s19, 1
      %p84 = por %p82, %p83
      %p86 = scmp.ne.s32.totalorder %s71, %s85
      %p87 = scmp.eq.s32.totalorder %s19, 0
      %p88 = por %p86, %p87
      %s89 = ssub.s32 %s13, %s20
      %p90 = scmp.eq.s32.totalorder %s89, 0
      %s92 = sadd.s32 %s91, 1
      %s93 = scalar_select %p90, %s91, %s92
      %p96 = pneg %p90
      %p97 = scmp.eq.s32.totalorder %s13, 1
      %p98 = por %p96, %p97
      %p99 = scmp.ne.s32.totalorder %s91, %s94
      %p100 = scmp.eq.s32.totalorder %s13, 0
      %p101 = por %p99, %p100
      %p102 = scmp.ne.s32.totalorder %s91, %s94
      %p103 = scmp.eq.s32.totalorder %s18, 1
      %p104 = por %p102, %p103
      %p105 = scmp.ne.s32.totalorder %s94, %s95
      %p106 = scmp.eq.s32.totalorder %s18, 0
      %p107 = por %p105, %p106
      %p108 = scmp.ne.s32.totalorder %s94, %s95
      %p109 = scmp.eq.s32.totalorder %s19, 1
      %p110 = por %p108, %p109
      %p112 = scmp.ne.s32.totalorder %s95, %s111
      %p113 = scmp.eq.s32.totalorder %s19, 0
      %p114 = por %p112, %p113
      %s115 = ssub.s32 %s13, %s20
      %p116 = scmp.eq.s32.totalorder %s115, 0
      %s118 = sadd.s32 %s117, 1
      %s119 = scalar_select %p116, %s117, %s118
      %p122 = pneg %p116
      %p123 = scmp.eq.s32.totalorder %s13, 1
      %p124 = por %p122, %p123
      %p125 = scmp.ne.s32.totalorder %s117, %s120
      %p126 = scmp.eq.s32.totalorder %s13, 0
      %p127 = por %p125, %p126
      %p128 = scmp.ne.s32.totalorder %s117, %s120
      %p129 = scmp.eq.s32.totalorder %s18, 1
      %p130 = por %p128, %p129
      %p131 = scmp.ne.s32.totalorder %s120, %s121
      %p132 = scmp.eq.s32.totalorder %s18, 0
      %p133 = por %p131, %p132
      %p134 = scmp.ne.s32.totalorder %s120, %s121
      %p135 = scmp.eq.s32.totalorder %s19, 1
      %p136 = por %p134, %p135
      %p138 = scmp.ne.s32.totalorder %s121, %s137
      %p139 = scmp.eq.s32.totalorder %s19, 0
      %p140 = por %p138, %p139
      %s141 = ssub.s32 %s13, %s20
      %p142 = scmp.eq.s32.totalorder %s141, 0
      %s144 = sadd.s32 %s143, 1
      %s145 = scalar_select %p142, %s143, %s144
      %p148 = pneg %p142
      %p149 = scmp.eq.s32.totalorder %s13, 1
      %p150 = por %p148, %p149
      %p151 = scmp.ne.s32.totalorder %s143, %s146
      %p152 = scmp.eq.s32.totalorder %s13, 0
      %p153 = por %p151, %p152
      %p154 = scmp.ne.s32.totalorder %s143, %s146
      %p155 = scmp.eq.s32.totalorder %s18, 1
      %p156 = por %p154, %p155
      %p157 = scmp.ne.s32.totalorder %s146, %s147
      %p158 = scmp.eq.s32.totalorder %s18, 0
      %p159 = por %p157, %p158
      %p160 = scmp.ne.s32.totalorder %s146, %s147
      %p161 = scmp.eq.s32.totalorder %s19, 1
      %p162 = por %p160, %p161
      %p164 = scmp.ne.s32.totalorder %s147, %s163
      %p165 = scmp.eq.s32.totalorder %s19, 0
      %p166 = por %p164, %p165
      %s167 = ssub.s32 %s13, %s20
      %p168 = scmp.eq.s32.totalorder %s167, 0
      %s170 = sadd.s32 %s169, 1
      %s171 = scalar_select %p168, %s169, %s170
      %p174 = pneg %p168
      %p175 = scmp.eq.s32.totalorder %s13, 1
      %p176 = por %p174, %p175
      %p177 = scmp.ne.s32.totalorder %s169, %s172
      %p178 = scmp.eq.s32.totalorder %s13, 0
      %p179 = por %p177, %p178
      %p180 = scmp.ne.s32.totalorder %s169, %s172
      %p181 = scmp.eq.s32.totalorder %s18, 1
      %p182 = por %p180, %p181
      %p183 = scmp.ne.s32.totalorder %s172, %s173
      %p184 = scmp.eq.s32.totalorder %s18, 0
      %p185 = por %p183, %p184
      %p186 = scmp.ne.s32.totalorder %s172, %s173
      %p187 = scmp.eq.s32.totalorder %s19, 1
      %p188 = por %p186, %p187
      %p190 = scmp.ne.s32.totalorder %s173, %s189
      %p191 = scmp.eq.s32.totalorder %s19, 0
      %p192 = por %p190, %p191
      %p193 = scmp.le.s32.totalorder 1, %s13
      %p194 = scmp.lt.s32.totalorder %s13, 3
      %p195 = pnand %p193, %p194
      %p196 = pneg %p195
      // Predicated region
      $region9: #{tpu_custom_call.1} parent=5 // pred_check
        _
      $region10: #{tpu_custom_call.1} parent=5 // pred_check_branch
        %198 = sbr.rel (%p195) target = $region12
      $region11: #{tpu_custom_call.1} parent=5 // pred_region
        %s199 = ssub.s32 %s13, 1
        // Predicated region
        $region13: #{tpu_custom_call.1} parent=11 // pred_check
          %p200 = pneg %p60
        $region14: #{tpu_custom_call.1} parent=11 // pred_check_branch
          %202 = sbr.rel (%p200) target = $region16
        $region15: #{tpu_custom_call.1} parent=11 // pred_region
          _
        $region16: #{tpu_custom_call.1} parent=11 // pred_fallthru
          _
        // Predicated region
        $region17: #{tpu_custom_call.1} parent=11 // pred_check
          %p203 = pneg %p81
        $region18: #{tpu_custom_call.1} parent=11 // pred_check_branch
          %205 = sbr.rel (%p203) target = $region20
        $region19: #{tpu_custom_call.1} parent=11 // pred_region
          _
        $region20: #{tpu_custom_call.1} parent=11 // pred_fallthru
          _
      $region12: #{tpu_custom_call.1} parent=5 // pred_fallthru
        _
      %p206 = scmp.lt.s32.totalorder %s13, 2
      // Predicated region
      $region21: #{tpu_custom_call.1} parent=5 // pred_check
        %p207 = pneg %p206
      $region22: #{tpu_custom_call.1} parent=5 // pred_check_branch
        %209 = sbr.rel (%p207) target = $region24
      $region23: #{tpu_custom_call.1} parent=5 // pred_region
        // Predicated region
        $region25: #{tpu_custom_call.1} parent=23 // pred_check
          %p210 = pneg %p33
        $region26: #{tpu_custom_call.1} parent=23 // pred_check_branch
          %212 = sbr.rel (%p210) target = $region28
        $region27: #{tpu_custom_call.1} parent=23 // pred_region
          %s213 = smul.u32 4, %s13
          %s214 = ssub.s32 6, %s213
          %p215 = scmp.lt.s32.totalorder %s214, 4
          %s216 = scalar_select %p215, %s214, 4
          %s217 = smul.u32 128, %s216
          %p218 = scmp.lt.s32.totalorder %s213, 5
          %s219 = scalar_select %p218, %s213, 5
          %s220 = smul.addr %s219, 8
          %s221 = scalar_lea.vmem %s0, %s220
          %s222 = smul.u32 4, %s13
          %s223 = ssub.s32 6, %s222
          %p224 = scmp.lt.s32.totalorder %s223, 4
          %s225 = scalar_select %p224, %s223, 4
          %s226 = smul.u32 128, %s225
        $region28: #{tpu_custom_call.1} parent=23 // pred_fallthru
          _
        // Predicated region
        $region29: #{tpu_custom_call.1} parent=23 // pred_check
          %p227 = pneg %p101
        $region30: #{tpu_custom_call.1} parent=23 // pred_check_branch
          %229 = sbr.rel (%p227) target = $region32
        $region31: #{tpu_custom_call.1} parent=23 // pred_region
          %s230 = smul.u32 4, %s13
          %s231 = ssub.s32 6, %s230
          %p232 = scmp.lt.s32.totalorder %s231, 4
          %s233 = scalar_select %p232, %s231, 4
          %s234 = smul.u32 128, %s233
          %p235 = scmp.lt.s32.totalorder %s230, 5
          %s236 = scalar_select %p235, %s230, 5
          %s237 = smul.addr %s236, 8
          %s238 = scalar_lea.vmem %s3, %s237
          %s239 = smul.u32 4, %s13
          %s240 = ssub.s32 6, %s239
          %p241 = scmp.lt.s32.totalorder %s240, 4
          %s242 = scalar_select %p241, %s240, 4
          %s243 = smul.u32 128, %s242
        $region32: #{tpu_custom_call.1} parent=23 // pred_fallthru
          _
      $region24: #{tpu_custom_call.1} parent=5 // pred_fallthru
        _
      %p244 = scmp.le.s32.totalorder 1, %s13
      %p245 = scmp.lt.s32.totalorder %s13, 3
      %p246 = pnand %p244, %p245
      %p247 = pneg %p246
      // Predicated region
      $region33: #{tpu_custom_call.1} parent=5 // pred_check
        _
      $region34: #{tpu_custom_call.1} parent=5 // pred_check_branch
        %249 = sbr.rel (%p246) target = $region36
      $region35: #{tpu_custom_call.1} parent=5 // pred_region
        %s250 = ssub.s32 %s13, 1
        %s251 = smul.u32 4, %s18
        %s252 = ssub.s32 6, %s251
        %p253 = scmp.lt.s32.totalorder %s252, 4
        %s254 = scalar_select %p253, %s252, 4
        %s255 = smul.u32 128, %s254
        %p256 = scmp.lt.s32.totalorder %s251, 5
        %s257 = scalar_select %p256, %s251, 5
        %s258 = smul.addr %s257, 8
        %s259 = scalar_lea.vmem %s0, %s258
        %p260 = pneg %p39
        %p261 = pneg %p36
        %p262 = pneg %p60
        %p263 = pneg %p57
        %p264 = pneg %p81
        %p265 = pneg %p78
        %s266 = smul.u32 4, %s18
        %s267 = ssub.s32 6, %s266
        %p268 = scmp.lt.s32.totalorder %s267, 4
        %s269 = scalar_select %p268, %s267, 4
        %s270 = smul.u32 128, %s269
        %p271 = scmp.lt.s32.totalorder %s266, 5
        %s272 = scalar_select %p271, %s266, 5
        %s273 = smul.addr %s272, 8
        %s274 = scalar_lea.vmem %s3, %s273
        %p275 = pneg %p107
        %p276 = pneg %p104
        %p277 = pneg %p133
        %p278 = pneg %p130
        %s279 = sand.u32 %s120, 1
        %s280 = sand.u32 %s120, 1
        %s281 = smul.addr %s280, 32
        %s282 = scalar_lea.vmem [#allocation2], %s281
        %p283 = pneg %p159
        %p284 = pneg %p156
        %s285 = sand.u32 %s146, 1
        %s286 = sand.u32 %s146, 1
        %s287 = smul.addr %s286, 32
        %s288 = scalar_lea.vmem [#allocation3], %s287
        %p289 = pneg %p185
        %p290 = pneg %p182
        %s291 = sand.u32 %s172, 1
        %s292 = sand.u32 %s172, 1
        %s293 = smul.addr %s292, 32
        %s294 = scalar_lea.vmem [#allocation4], %s293
        %s295 = smul.u32 4, %s18
        %s296 = ssub.s32 6, %s295
        %p297 = scmp.lt.s32.totalorder %s296, 4
        %s298 = scalar_select %p297, %s296, 4
        %s299 = smul.u32 128, %s298
        %p300 = scmp.lt.s32.totalorder %s295, 5
        %s301 = scalar_select %p300, %s295, 5
        %s302 = smul.addr %s301, 8
        %s303 = scalar_lea.vmem %s0, %s302
        %s304 = smul.u32 4, %s18
        %s305 = ssub.s32 6, %s304
        %p306 = scmp.lt.s32.totalorder %s305, 4
        %s307 = scalar_select %p306, %s305, 4
        %s308 = smul.u32 128, %s307
        %s309 = smul.u32 4, %s18
        %s310 = ssub.s32 6, %s309
        %p311 = scmp.lt.s32.totalorder %s310, 4
        %s312 = scalar_select %p311, %s310, 4
        %s313 = smul.u32 128, %s312
        %p314 = scmp.lt.s32.totalorder %s309, 5
        %s315 = scalar_select %p314, %s309, 5
        %s316 = smul.addr %s315, 8
        %s317 = scalar_lea.vmem %s3, %s316
        %s318 = smul.u32 4, %s18
        %s319 = ssub.s32 6, %s318
        %p320 = scmp.lt.s32.totalorder %s319, 4
        %s321 = scalar_select %p320, %s319, 4
        %s322 = smul.u32 128, %s321
        %s323 = smul.u32 4, %s18
        %s324 = ssub.s32 6, %s323
        %p325 = scmp.lt.s32.totalorder %s324, 4
        %s326 = scalar_select %p325, %s324, 4
        %s327 = smul.u32 128, %s326
        %s328 = smul.u32 4, %s18
        %s329 = ssub.s32 6, %s328
        %p330 = scmp.lt.s32.totalorder %s329, 4
        %s331 = scalar_select %p330, %s329, 4
        %s332 = smul.u32 128, %s331
        %s333 = smul.u32 4, %s18
        %s334 = ssub.s32 6, %s333
        %p335 = scmp.lt.s32.totalorder %s334, 4
        %s336 = scalar_select %p335, %s334, 4
        %s337 = smul.u32 128, %s336
        %v338 = vld [vmem:[%s303] sm:$0xff]
        %v339 = vld [vmem:[%s303 + $0x8] sm:$0xff]
        %v340 = vld [vmem:[%s303 + $0x10] sm:$0xff]
        %v341 = vld [vmem:[%s303 + $0x18] sm:$0xff]
        %v342 = vld [vmem:[%s1] sm:$0xff]
        %v343 = vld [vmem:[%s1 + $0x8] sm:$0xff]
        %v344 = vld [vmem:[%s1 + $0x10] sm:$0xff]
        %v345 = vld [vmem:[%s1 + $0x18] sm:$0xff]
        %v346 = vld [vmem:[%s1 + $0x20] sm:$0xff]
        %v347 = vld [vmem:[%s1 + $0x28] sm:$0xff]
        %v348 = vld [vmem:[%s1 + $0x30] sm:$0xff]
        %v349 = vld [vmem:[%s1 + $0x38] sm:$0xff]
        %v350 = vld [vmem:[%s2] sm:$0x3]
        %v352 = vlaneseq
        %v353 = vshrl.u32 %v352, 7
        %v354 = vsub.s32 0, %v353
        %v355 = vrot.slane %v350, %v354
        %v356 = vlaneseq
        %v357 = vshrl.u32 %v356, 7
        %v358 = vsub.s32 1, %v357
        %v359 = vrot.slane %v350, %v358
        %vm362 = vcmask 261120
        %v364 = vsel %vm362, %v338, 0
        %v367 = vsel %vm362, %v339, 0
        %v370 = vsel %vm362, %v340, 0
        %v373 = vsel %vm362, %v341, 0
        %375 = vmatprep.subr.mxu0 0.0
        %376 = vmatpush1.msra.mxu0 0.0
        %377 = vmatprep.subr.mxu0 0.0
        %378 = vmatpush1.msra.mxu0 0.0
        %379 = vmatprep.subr.mxu0 0.0
        %380 = vmatpush1.msra.mxu0 0.0
        %381 = vmatprep.subr.mxu0 0.0
        %382 = vmatpush1.msra.mxu0 0.0
        %383 = vmatprep.subr.mxu0 0.0
        %384 = vmatpush1.msra.mxu0 0.0
        %385 = vmatprep.subr.mxu0 0.0
        %386 = vmatpush1.msra.mxu0 0.0
        %387 = vmatprep.subr.mxu0 0.0
        %388 = vmatpush1.msra.mxu0 0.0
        %389 = vmatprep.subr.mxu0 0.0
        %390 = vmatpush1.msra.mxu0 0.0
        %391 = vmatprep.subr.mxu0 0.0
        %392 = vmatpush1.msra.mxu0 0.0
        %393 = vmatprep.subr.mxu0 0.0
        %394 = vmatpush1.msra.mxu0 0.0
        %395 = vmatprep.subr.mxu0 0.0
        %396 = vmatpush1.msra.mxu0 0.0
        %397 = vmatprep.subr.mxu0 0.0
        %398 = vmatpush1.msra.mxu0 0.0
        %399 = vmatprep.subr.mxu0 %v349
        %400 = vmatpush1.msra.mxu0 %v348
        %401 = vmatprep.subr.mxu0 %v347
        %402 = vmatpush1.msra.mxu0 %v346
        %403 = vmatprep.subr.mxu0 %v345
        %404 = vmatpush1.msra.mxu0 %v344
        %405 = vmatprep.subr.mxu0 %v343
        %406 = vmatpush1.msra.mxu0 %v342
        %407 = vmatprep.subr.mxu0 0.0
        %408 = vmatpush2.msra.mxu0 0.0
        %409 = vmatprep.subr.mxu0 0.0
        %410 = vmatpush2.msra.mxu0 0.0
        %411 = vmatprep.subr.mxu0 0.0
        %412 = vmatpush2.msra.mxu0 0.0
        %413 = vmatprep.subr.mxu0 0.0
        %414 = vmatpush2.msra.mxu0 0.0
        %415 = vmatprep.subr.mxu0 0.0
        %416 = vmatpush2.msra.mxu0 0.0
        %417 = vmatprep.subr.mxu0 0.0
        %418 = vmatpush2.msra.mxu0 0.0
        %419 = vmatprep.subr.mxu0 0.0
        %420 = vmatpush2.msra.mxu0 0.0
        %421 = vmatprep.subr.mxu0 0.0
        %422 = vmatpush2.msra.mxu0 0.0
        %423 = vmatprep.subr.mxu0 0.0
        %424 = vmatpush2.msra.mxu0 0.0
        %425 = vmatprep.subr.mxu0 0.0
        %426 = vmatpush2.msra.mxu0 0.0
        %427 = vmatprep.subr.mxu0 0.0
        %428 = vmatpush2.msra.mxu0 0.0
        %429 = vmatprep.subr.mxu0 0.0
        %430 = vmatpush2.msra.mxu0 0.0
        %431 = vmatprep.subr.mxu0 0.0
        %432 = vmatpush2.msra.mxu0 0.0
        %433 = vmatprep.subr.mxu0 0.0
        %434 = vmatpush2.msra.mxu0 0.0
        %435 = vmatprep.subr.mxu0 0.0
        %436 = vmatpush2.msra.mxu0 0.0
        %437 = vmatprep.subr.mxu0 0.0
        %438 = vmatpush2.msra.mxu0 0.0
        %439 = vmatprep.mubr.f32.mxu0 0.0
        %440 = vmatmul.mubr.f32.gmra.mxu0 %v364
        %v441 = vpop.f32.mrf.mxu0
        %v442 = vadd.f32 %v355, %v441
        %v443 = vpop.f32.mrf.mxu0
        %v444 = vadd.f32 %v359, %v443
        %445 = vmatprep.mubr.f32.mxu0 0.0
        %446 = vmatmul.mubr.f32.gmra.mxu0 %v367
        %v447 = vpop.f32.mrf.mxu0
        %v448 = vadd.f32 %v355, %v447
        %v449 = vpop.f32.mrf.mxu0
        %v450 = vadd.f32 %v359, %v449
        %451 = vmatprep.mubr.f32.mxu0 0.0
        %452 = vmatmul.mubr.f32.gmra.mxu0 %v370
        %v453 = vpop.f32.mrf.mxu0
        %v454 = vadd.f32 %v355, %v453
        %v455 = vpop.f32.mrf.mxu0
        %v456 = vadd.f32 %v359, %v455
        %457 = vmatprep.mubr.f32.mxu0 0.0
        %458 = vmatmul.mubr.f32.gmra.mxu0 %v373
        %v459 = vpop.f32.mrf.mxu0
        %v460 = vadd.f32 %v355, %v459
        %v461 = vpop.f32.mrf.mxu0
        %v462 = vadd.f32 %v359, %v461
        %463 = vdwg.mxu0
        %vm464 = vcmp.gt.f32.partialorder %v444, 20.0
        %vm465 = vcmp.gt.f32.partialorder %v450, 20.0
        %vm466 = vcmp.gt.f32.partialorder %v456, 20.0
        %vm467 = vcmp.gt.f32.partialorder %v462, 20.0
        %v468 = vmul.f32 %v444, 1.442695
        %v469 = vpow.pop %v468
        %v470 = vmul.f32 %v450, 1.442695
        %v471 = vpow.pop %v470
        %v472 = vmul.f32 %v456, 1.442695
        %v473 = vpow.pop %v472
        %v474 = vmul.f32 %v462, 1.442695
        %v475 = vpow.pop %v474
        %v476 = vadd.f32 %v469, 1.0
        %v477 = vlog2.pop %v476
        %v478 = vmul.f32 %v477, 0.6931472
        %v479 = vmul.f32 -0.5, %v469
        %v480 = vadd.f32 %v479, 1.0
        %v481 = vmul.f32 %v480, %v469
        %v482 = vand.u32 2147483647, %v469
        %vm483 = vcmp.lt.f32.partialorder %v482, 0.0004427343
        %v484 = vsel %vm483, %v481, %v478
        %v485 = vadd.f32 %v471, 1.0
        %v486 = vlog2.pop %v485
        %v487 = vmul.f32 %v486, 0.6931472
        %v488 = vmul.f32 -0.5, %v471
        %v489 = vadd.f32 %v488, 1.0
        %v490 = vmul.f32 %v489, %v471
        %v491 = vand.u32 2147483647, %v471
        %vm492 = vcmp.lt.f32.partialorder %v491, 0.0004427343
        %v493 = vsel %vm492, %v490, %v487
        %v494 = vadd.f32 %v473, 1.0
        %v495 = vlog2.pop %v494
        %v496 = vmul.f32 %v495, 0.6931472
        %v497 = vmul.f32 -0.5, %v473
        %v498 = vadd.f32 %v497, 1.0
        %v499 = vmul.f32 %v498, %v473
        %v500 = vand.u32 2147483647, %v473
        %vm501 = vcmp.lt.f32.partialorder %v500, 0.0004427343
        %v502 = vsel %vm501, %v499, %v496
        %v503 = vadd.f32 %v475, 1.0
        %v504 = vlog2.pop %v503
        %v505 = vmul.f32 %v504, 0.6931472
        %v506 = vmul.f32 -0.5, %v475
        %v507 = vadd.f32 %v506, 1.0
        %v508 = vmul.f32 %v507, %v475
        %v509 = vand.u32 2147483647, %v475
        %vm510 = vcmp.lt.f32.partialorder %v509, 0.0004427343
        %v511 = vsel %vm510, %v508, %v505
        %v512 = vsel %vm464, %v444, %v484
        %v513 = vsel %vm465, %v450, %v493
        %v514 = vsel %vm466, %v456, %v502
        %v515 = vsel %vm467, %v462, %v511
        %v516 = vadd.f32 %v512, 1e-07
        %v517 = vadd.f32 %v513, 1e-07
        %v518 = vadd.f32 %v514, 1e-07
        %v519 = vadd.f32 %v515, 1e-07
        %v520 = vld [vmem:[%s317] sm:$0xff]
        %v521 = vld [vmem:[%s317 + $0x8] sm:$0xff]
        %v522 = vld [vmem:[%s317 + $0x10] sm:$0xff]
        %v523 = vld [vmem:[%s317 + $0x18] sm:$0xff]
        %v524 = vmul.f32 %v516, %v520
        %v525 = vmul.f32 %v517, %v521
        %v526 = vmul.f32 %v518, %v522
        %v527 = vmul.f32 %v519, %v523
        %v528 = vadd.f32 %v442, %v524
        %v529 = vadd.f32 %v448, %v525
        %v530 = vadd.f32 %v454, %v526
        %v531 = vadd.f32 %v460, %v527
        %vm532 = vcmask 130048
        %533 = vst.msk [vmem:[%s282] sm:$0xff] %vm532, %v442
        %534 = vst.msk [vmem:[%s282 + $0x8] sm:$0xff] %vm532, %v448
        %535 = vst.msk [vmem:[%s282 + $0x10] sm:$0xff] %vm532, %v454
        %536 = vst.msk [vmem:[%s282 + $0x18] sm:$0xff] %vm532, %v460
        %537 = vst.msk [vmem:[%s288] sm:$0xff] %vm532, %v516
        %538 = vst.msk [vmem:[%s288 + $0x8] sm:$0xff] %vm532, %v517
        %539 = vst.msk [vmem:[%s288 + $0x10] sm:$0xff] %vm532, %v518
        %540 = vst.msk [vmem:[%s288 + $0x18] sm:$0xff] %vm532, %v519
        %541 = vst.msk [vmem:[%s294] sm:$0xff] %vm532, %v528
        %542 = vst.msk [vmem:[%s294 + $0x8] sm:$0xff] %vm532, %v529
        %543 = vst.msk [vmem:[%s294 + $0x10] sm:$0xff] %vm532, %v530
        %544 = vst.msk [vmem:[%s294 + $0x18] sm:$0xff] %vm532, %v531
        %s545 = sand.u32 %s120, 1
        %s546 = sand.u32 %s120, 1
        %s547 = smul.addr %s546, 32
        %s548 = scalar_lea.vmem [#allocation2], %s547
        %s549 = sand.u32 %s146, 1
        %s550 = sand.u32 %s146, 1
        %s551 = smul.addr %s550, 32
        %s552 = scalar_lea.vmem [#allocation3], %s551
        %s553 = sand.u32 %s172, 1
        %s554 = sand.u32 %s172, 1
        %s555 = smul.addr %s554, 32
        %s556 = scalar_lea.vmem [#allocation4], %s555
        // Predicated region
        $region37: #{tpu_custom_call.1} parent=35 // pred_check
          %p557 = pneg %p130
        $region38: #{tpu_custom_call.1} parent=35 // pred_check_branch
          %559 = sbr.rel (%p557) target = $region40
        $region39: #{tpu_custom_call.1} parent=35 // pred_region
          %s560 = smul.u32 4, %s18
          %s561 = ssub.s32 6, %s560
          %p562 = scmp.lt.s32.totalorder %s561, 4
          %s563 = scalar_select %p562, %s561, 4
          %s564 = smul.u32 128, %s563
          %p565 = scmp.ne.s32.totalorder 0, %s564
          %s566 = smul.addr %s560, 8
          %s567 = scalar_lea.vmem %s4, %s566
          // Predicated region
          $region41: #{tpu_custom_call.1} parent=39 // pred_check
            %p568 = pneg %p565
          $region42: #{tpu_custom_call.1} parent=39 // pred_check_branch
            %570 = sbr.rel (%p568) target = $region44
          $region43: #{tpu_custom_call.1} parent=39 // pred_region
            // Predicated region
            $region45: #{tpu_custom_call.1} parent=43 // pred_check
              _
            $region46: #{tpu_custom_call.1} parent=43 // pred_check_branch
              %572 = sbr.rel (0) target = $region48
            $region47: #{tpu_custom_call.1} parent=43 // pred_region
              // Predicated region
              $region67: #{tpu_custom_call.1} parent=47 // pred_check
                _
              $region68: #{tpu_custom_call.1} parent=47 // pred_check_branch
                %628 = sbr.rel (0) target = $region70
              $region69: #{tpu_custom_call.1} parent=47 // pred_region
                %s629 = sshrl.u32 %s563, 2
                // While loop
                $region71: #{tpu_custom_call.1} parent=69 // loop_pre_header
                  _
                $region72: #{tpu_custom_call.1} parent=69 // loop_header
                  %s631 = sphi 0, %s633
                  %p632 = scmp.ge.s32.totalorder %s631, %s629
                  %s636 = sphi 0, %s649
                  %s637 = sphi %s548, %s652
                  %s638 = sphi %s567, %s653
                $region73: #{tpu_custom_call.1} parent=69 // loop_header_branch
                  %635 = sbr.rel (%p632) target = $region77
                $region74: #{tpu_custom_call.1} parent=69 // loop_body
                  %v639 = vld [vmem:[%s637] sm:$0xff]
                  %640 = vst [vmem:[%s638] sm:$0xff] %v639
                  %v641 = vld [vmem:[%s637 + $0x8] sm:$0xff]
                  %642 = vst [vmem:[%s638 + $0x8] sm:$0xff] %v641
                  %v643 = vld [vmem:[%s637 + $0x10] sm:$0xff]
                  %644 = vst [vmem:[%s638 + $0x10] sm:$0xff] %v643
                  %v645 = vld [vmem:[%s637 + $0x18] sm:$0xff]
                  %646 = vst [vmem:[%s638 + $0x18] sm:$0xff] %v645
                  %s647 = sadd.s32 1, %s636
                  %p648 = scmp.ge.s32.totalorder %s647, %s629
                  %s649 = scalar_select %p648, 0, %s647
                  %s650 = smul.u32 %s649, 32
                  %s651 = smul.u32 %s649, 32
                  %s652 = scalar_lea.vmem %s548, %s650 [#allocation2]
                  %s653 = scalar_lea.vmem %s567, %s651
                $region75: #{tpu_custom_call.1} parent=69 // loop_footer
                  %s633 = sadd.s32 %s631, 1
                $region76: #{tpu_custom_call.1} parent=69 // loop_footer_branch
                  %630 = sbr.rel target = $region72
                $region77: #{tpu_custom_call.1} parent=69 // loop_exit
                  _
                %s654 = sshrl.u32 %s563, 2
                %s655 = sand.u32 %s563, 3
                %s656 = smul.u32 %s654, 4
                %s657 = smul.u32 8, %s656
                %s658 = scalar_lea.vmem %s548, %s657 [#allocation2]
                %s659 = smul.u32 8, %s656
                %s660 = scalar_lea.vmem %s567, %s659
                // While loop
                $region78: #{tpu_custom_call.1} parent=69 // loop_pre_header
                  _
                $region79: #{tpu_custom_call.1} parent=69 // loop_header
                  %s662 = sphi 0, %s664
                  %p663 = scmp.ge.s32.totalorder %s662, %s655
                  %s667 = sphi 0, %s674
                  %s668 = sphi %s658, %s677
                  %s669 = sphi %s660, %s678
                $region80: #{tpu_custom_call.1} parent=69 // loop_header_branch
                  %666 = sbr.rel (%p663) target = $region84
                $region81: #{tpu_custom_call.1} parent=69 // loop_body
                  %v670 = vld [vmem:[%s668] sm:$0xff]
                  %671 = vst [vmem:[%s669] sm:$0xff] %v670
                  %s672 = sadd.s32 1, %s667
                  %p673 = scmp.ge.s32.totalorder %s672, %s655
                  %s674 = scalar_select %p673, 0, %s672
                  %s675 = smul.u32 %s674, 8
                  %s676 = smul.u32 %s674, 8
                  %s677 = scalar_lea.vmem %s658, %s675 [#allocation2]
                  %s678 = scalar_lea.vmem %s660, %s676
                $region82: #{tpu_custom_call.1} parent=69 // loop_footer
                  %s664 = sadd.s32 %s662, 1
                $region83: #{tpu_custom_call.1} parent=69 // loop_footer_branch
                  %661 = sbr.rel target = $region79
                $region84: #{tpu_custom_call.1} parent=69 // loop_exit
                  _
              $region70: #{tpu_custom_call.1} parent=47 // pred_fallthru
                _
              // Predicated region
              $region85: #{tpu_custom_call.1} parent=47 // pred_check
                _
              $region86: #{tpu_custom_call.1} parent=47 // pred_check_branch
                %680 = sbr.rel target = $region88
              $region87: #{tpu_custom_call.1} parent=47 // pred_region
                _
              $region88: #{tpu_custom_call.1} parent=47 // pred_fallthru
                _
            $region48: #{tpu_custom_call.1} parent=43 // pred_fallthru
              _
            // Predicated region
            $region49: #{tpu_custom_call.1} parent=43 // pred_check
              _
            $region50: #{tpu_custom_call.1} parent=43 // pred_check_branch
              %574 = sbr.rel target = $region52
            $region51: #{tpu_custom_call.1} parent=43 // pred_region
              %s576 = ssub.s32 256, 1
              %s577 = sshrl.u32 %s563, 2
              // While loop
              $region53: #{tpu_custom_call.1} parent=51 // loop_pre_header
                _
              $region54: #{tpu_custom_call.1} parent=51 // loop_header
                %s579 = sphi 0, %s581
                %p580 = scmp.ge.s32.totalorder %s579, %s577
                %s584 = sphi 0, %s597
                %s585 = sphi %s548, %s600
                %s586 = sphi %s567, %s601
              $region55: #{tpu_custom_call.1} parent=51 // loop_header_branch
                %583 = sbr.rel (%p580) target = $region59
              $region56: #{tpu_custom_call.1} parent=51 // loop_body
                %v587 = vld [vmem:[%s585] sm:%s576]
                %588 = vst [vmem:[%s586] sm:%s576] %v587
                %v589 = vld [vmem:[%s585 + $0x8] sm:%s576]
                %590 = vst [vmem:[%s586 + $0x8] sm:%s576] %v589
                %v591 = vld [vmem:[%s585 + $0x10] sm:%s576]
                %592 = vst [vmem:[%s586 + $0x10] sm:%s576] %v591
                %v593 = vld [vmem:[%s585 + $0x18] sm:%s576]
                %594 = vst [vmem:[%s586 + $0x18] sm:%s576] %v593
                %s595 = sadd.s32 1, %s584
                %p596 = scmp.ge.s32.totalorder %s595, %s577
                %s597 = scalar_select %p596, 0, %s595
                %s598 = smul.u32 %s597, 32
                %s599 = smul.u32 %s597, 32
                %s600 = scalar_lea.vmem %s548, %s598 [#allocation2]
                %s601 = scalar_lea.vmem %s567, %s599
              $region57: #{tpu_custom_call.1} parent=51 // loop_footer
                %s581 = sadd.s32 %s579, 1
              $region58: #{tpu_custom_call.1} parent=51 // loop_footer_branch
                %578 = sbr.rel target = $region54
              $region59: #{tpu_custom_call.1} parent=51 // loop_exit
                _
              %s602 = sshrl.u32 %s563, 2
              %s603 = sand.u32 %s563, 3
              %s604 = smul.u32 %s602, 4
              %s605 = smul.u32 8, %s604
              %s606 = scalar_lea.vmem %s548, %s605 [#allocation2]
              %s607 = smul.u32 8, %s604
              %s608 = scalar_lea.vmem %s567, %s607
              // While loop
              $region60: #{tpu_custom_call.1} parent=51 // loop_pre_header
                _
              $region61: #{tpu_custom_call.1} parent=51 // loop_header
                %s610 = sphi 0, %s612
                %p611 = scmp.ge.s32.totalorder %s610, %s603
                %s615 = sphi 0, %s622
                %s616 = sphi %s606, %s625
                %s617 = sphi %s608, %s626
              $region62: #{tpu_custom_call.1} parent=51 // loop_header_branch
                %614 = sbr.rel (%p611) target = $region66
              $region63: #{tpu_custom_call.1} parent=51 // loop_body
                %v618 = vld [vmem:[%s616] sm:%s576]
                %619 = vst [vmem:[%s617] sm:%s576] %v618
                %s620 = sadd.s32 1, %s615
                %p621 = scmp.ge.s32.totalorder %s620, %s603
                %s622 = scalar_select %p621, 0, %s620
                %s623 = smul.u32 %s622, 8
                %s624 = smul.u32 %s622, 8
                %s625 = scalar_lea.vmem %s606, %s623 [#allocation2]
                %s626 = scalar_lea.vmem %s608, %s624
              $region64: #{tpu_custom_call.1} parent=51 // loop_footer
                %s612 = sadd.s32 %s610, 1
              $region65: #{tpu_custom_call.1} parent=51 // loop_footer_branch
                %609 = sbr.rel target = $region61
              $region66: #{tpu_custom_call.1} parent=51 // loop_exit
                _
            $region52: #{tpu_custom_call.1} parent=43 // pred_fallthru
              _
          $region44: #{tpu_custom_call.1} parent=39 // pred_fallthru
            _
          %681 = vnop
        $region40: #{tpu_custom_call.1} parent=35 // pred_fallthru
          _
        // Predicated region
        $region89: #{tpu_custom_call.1} parent=35 // pred_check
          %p682 = pneg %p156
        $region90: #{tpu_custom_call.1} parent=35 // pred_check_branch
          %684 = sbr.rel (%p682) target = $region92
        $region91: #{tpu_custom_call.1} parent=35 // pred_region
          %s685 = smul.u32 4, %s18
          %s686 = ssub.s32 6, %s685
          %p687 = scmp.lt.s32.totalorder %s686, 4
          %s688 = scalar_select %p687, %s686, 4
          %s689 = smul.u32 128, %s688
          %p690 = scmp.ne.s32.totalorder 0, %s689
          %s691 = smul.addr %s685, 8
          %s692 = scalar_lea.vmem %s5, %s691
          // Predicated region
          $region93: #{tpu_custom_call.1} parent=91 // pred_check
            %p693 = pneg %p690
          $region94: #{tpu_custom_call.1} parent=91 // pred_check_branch
            %695 = sbr.rel (%p693) target = $region96
          $region95: #{tpu_custom_call.1} parent=91 // pred_region
            // Predicated region
            $region97: #{tpu_custom_call.1} parent=95 // pred_check
              _
            $region98: #{tpu_custom_call.1} parent=95 // pred_check_branch
              %697 = sbr.rel (0) target = $region100
            $region99: #{tpu_custom_call.1} parent=95 // pred_region
              // Predicated region
              $region119: #{tpu_custom_call.1} parent=99 // pred_check
                _
              $region120: #{tpu_custom_call.1} parent=99 // pred_check_branch
                %753 = sbr.rel (0) target = $region122
              $region121: #{tpu_custom_call.1} parent=99 // pred_region
                %s754 = sshrl.u32 %s688, 2
                // While loop
                $region123: #{tpu_custom_call.1} parent=121 // loop_pre_header
                  _
                $region124: #{tpu_custom_call.1} parent=121 // loop_header
                  %s756 = sphi 0, %s758
                  %p757 = scmp.ge.s32.totalorder %s756, %s754
                  %s761 = sphi 0, %s774
                  %s762 = sphi %s552, %s777
                  %s763 = sphi %s692, %s778
                $region125: #{tpu_custom_call.1} parent=121 // loop_header_branch
                  %760 = sbr.rel (%p757) target = $region129
                $region126: #{tpu_custom_call.1} parent=121 // loop_body
                  %v764 = vld [vmem:[%s762] sm:$0xff]
                  %765 = vst [vmem:[%s763] sm:$0xff] %v764
                  %v766 = vld [vmem:[%s762 + $0x8] sm:$0xff]
                  %767 = vst [vmem:[%s763 + $0x8] sm:$0xff] %v766
                  %v768 = vld [vmem:[%s762 + $0x10] sm:$0xff]
                  %769 = vst [vmem:[%s763 + $0x10] sm:$0xff] %v768
                  %v770 = vld [vmem:[%s762 + $0x18] sm:$0xff]
                  %771 = vst [vmem:[%s763 + $0x18] sm:$0xff] %v770
                  %s772 = sadd.s32 1, %s761
                  %p773 = scmp.ge.s32.totalorder %s772, %s754
                  %s774 = scalar_select %p773, 0, %s772
                  %s775 = smul.u32 %s774, 32
                  %s776 = smul.u32 %s774, 32
                  %s777 = scalar_lea.vmem %s552, %s775 [#allocation3]
                  %s778 = scalar_lea.vmem %s692, %s776
                $region127: #{tpu_custom_call.1} parent=121 // loop_footer
                  %s758 = sadd.s32 %s756, 1
                $region128: #{tpu_custom_call.1} parent=121 // loop_footer_branch
                  %755 = sbr.rel target = $region124
                $region129: #{tpu_custom_call.1} parent=121 // loop_exit
                  _
                %s779 = sshrl.u32 %s688, 2
                %s780 = sand.u32 %s688, 3
                %s781 = smul.u32 %s779, 4
                %s782 = smul.u32 8, %s781
                %s783 = scalar_lea.vmem %s552, %s782 [#allocation3]
                %s784 = smul.u32 8, %s781
                %s785 = scalar_lea.vmem %s692, %s784
                // While loop
                $region130: #{tpu_custom_call.1} parent=121 // loop_pre_header
                  _
                $region131: #{tpu_custom_call.1} parent=121 // loop_header
                  %s787 = sphi 0, %s789
                  %p788 = scmp.ge.s32.totalorder %s787, %s780
                  %s792 = sphi 0, %s799
                  %s793 = sphi %s783, %s802
                  %s794 = sphi %s785, %s803
                $region132: #{tpu_custom_call.1} parent=121 // loop_header_branch
                  %791 = sbr.rel (%p788) target = $region136
                $region133: #{tpu_custom_call.1} parent=121 // loop_body
                  %v795 = vld [vmem:[%s793] sm:$0xff]
                  %796 = vst [vmem:[%s794] sm:$0xff] %v795
                  %s797 = sadd.s32 1, %s792
                  %p798 = scmp.ge.s32.totalorder %s797, %s780
                  %s799 = scalar_select %p798, 0, %s797
                  %s800 = smul.u32 %s799, 8
                  %s801 = smul.u32 %s799, 8
                  %s802 = scalar_lea.vmem %s783, %s800 [#allocation3]
                  %s803 = scalar_lea.vmem %s785, %s801
                $region134: #{tpu_custom_call.1} parent=121 // loop_footer
                  %s789 = sadd.s32 %s787, 1
                $region135: #{tpu_custom_call.1} parent=121 // loop_footer_branch
                  %786 = sbr.rel target = $region131
                $region136: #{tpu_custom_call.1} parent=121 // loop_exit
                  _
              $region122: #{tpu_custom_call.1} parent=99 // pred_fallthru
                _
              // Predicated region
              $region137: #{tpu_custom_call.1} parent=99 // pred_check
                _
              $region138: #{tpu_custom_call.1} parent=99 // pred_check_branch
                %805 = sbr.rel target = $region140
              $region139: #{tpu_custom_call.1} parent=99 // pred_region
                _
              $region140: #{tpu_custom_call.1} parent=99 // pred_fallthru
                _
            $region100: #{tpu_custom_call.1} parent=95 // pred_fallthru
              _
            // Predicated region
            $region101: #{tpu_custom_call.1} parent=95 // pred_check
              _
            $region102: #{tpu_custom_call.1} parent=95 // pred_check_branch
              %699 = sbr.rel target = $region104
            $region103: #{tpu_custom_call.1} parent=95 // pred_region
              %s701 = ssub.s32 256, 1
              %s702 = sshrl.u32 %s688, 2
              // While loop
              $region105: #{tpu_custom_call.1} parent=103 // loop_pre_header
                _
              $region106: #{tpu_custom_call.1} parent=103 // loop_header
                %s704 = sphi 0, %s706
                %p705 = scmp.ge.s32.totalorder %s704, %s702
                %s709 = sphi 0, %s722
                %s710 = sphi %s552, %s725
                %s711 = sphi %s692, %s726
              $region107: #{tpu_custom_call.1} parent=103 // loop_header_branch
                %708 = sbr.rel (%p705) target = $region111
              $region108: #{tpu_custom_call.1} parent=103 // loop_body
                %v712 = vld [vmem:[%s710] sm:%s701]
                %713 = vst [vmem:[%s711] sm:%s701] %v712
                %v714 = vld [vmem:[%s710 + $0x8] sm:%s701]
                %715 = vst [vmem:[%s711 + $0x8] sm:%s701] %v714
                %v716 = vld [vmem:[%s710 + $0x10] sm:%s701]
                %717 = vst [vmem:[%s711 + $0x10] sm:%s701] %v716
                %v718 = vld [vmem:[%s710 + $0x18] sm:%s701]
                %719 = vst [vmem:[%s711 + $0x18] sm:%s701] %v718
                %s720 = sadd.s32 1, %s709
                %p721 = scmp.ge.s32.totalorder %s720, %s702
                %s722 = scalar_select %p721, 0, %s720
                %s723 = smul.u32 %s722, 32
                %s724 = smul.u32 %s722, 32
                %s725 = scalar_lea.vmem %s552, %s723 [#allocation3]
                %s726 = scalar_lea.vmem %s692, %s724
              $region109: #{tpu_custom_call.1} parent=103 // loop_footer
                %s706 = sadd.s32 %s704, 1
              $region110: #{tpu_custom_call.1} parent=103 // loop_footer_branch
                %703 = sbr.rel target = $region106
              $region111: #{tpu_custom_call.1} parent=103 // loop_exit
                _
              %s727 = sshrl.u32 %s688, 2
              %s728 = sand.u32 %s688, 3
              %s729 = smul.u32 %s727, 4
              %s730 = smul.u32 8, %s729
              %s731 = scalar_lea.vmem %s552, %s730 [#allocation3]
              %s732 = smul.u32 8, %s729
              %s733 = scalar_lea.vmem %s692, %s732
              // While loop
              $region112: #{tpu_custom_call.1} parent=103 // loop_pre_header
                _
              $region113: #{tpu_custom_call.1} parent=103 // loop_header
                %s735 = sphi 0, %s737
                %p736 = scmp.ge.s32.totalorder %s735, %s728
                %s740 = sphi 0, %s747
                %s741 = sphi %s731, %s750
                %s742 = sphi %s733, %s751
              $region114: #{tpu_custom_call.1} parent=103 // loop_header_branch
                %739 = sbr.rel (%p736) target = $region118
              $region115: #{tpu_custom_call.1} parent=103 // loop_body
                %v743 = vld [vmem:[%s741] sm:%s701]
                %744 = vst [vmem:[%s742] sm:%s701] %v743
                %s745 = sadd.s32 1, %s740
                %p746 = scmp.ge.s32.totalorder %s745, %s728
                %s747 = scalar_select %p746, 0, %s745
                %s748 = smul.u32 %s747, 8
                %s749 = smul.u32 %s747, 8
                %s750 = scalar_lea.vmem %s731, %s748 [#allocation3]
                %s751 = scalar_lea.vmem %s733, %s749
              $region116: #{tpu_custom_call.1} parent=103 // loop_footer
                %s737 = sadd.s32 %s735, 1
              $region117: #{tpu_custom_call.1} parent=103 // loop_footer_branch
                %734 = sbr.rel target = $region113
              $region118: #{tpu_custom_call.1} parent=103 // loop_exit
                _
            $region104: #{tpu_custom_call.1} parent=95 // pred_fallthru
              _
          $region96: #{tpu_custom_call.1} parent=91 // pred_fallthru
            _
          %806 = vnop
        $region92: #{tpu_custom_call.1} parent=35 // pred_fallthru
          _
        // Predicated region
        $region141: #{tpu_custom_call.1} parent=35 // pred_check
          %p807 = pneg %p182
        $region142: #{tpu_custom_call.1} parent=35 // pred_check_branch
          %809 = sbr.rel (%p807) target = $region144
        $region143: #{tpu_custom_call.1} parent=35 // pred_region
          %s810 = smul.u32 4, %s18
          %s811 = ssub.s32 6, %s810
          %p812 = scmp.lt.s32.totalorder %s811, 4
          %s813 = scalar_select %p812, %s811, 4
          %s814 = smul.u32 128, %s813
          %p815 = scmp.ne.s32.totalorder 0, %s814
          %s816 = smul.addr %s810, 8
          %s817 = scalar_lea.vmem %s6, %s816
          // Predicated region
          $region145: #{tpu_custom_call.1} parent=143 // pred_check
            %p818 = pneg %p815
          $region146: #{tpu_custom_call.1} parent=143 // pred_check_branch
            %820 = sbr.rel (%p818) target = $region148
          $region147: #{tpu_custom_call.1} parent=143 // pred_region
            // Predicated region
            $region149: #{tpu_custom_call.1} parent=147 // pred_check
              _
            $region150: #{tpu_custom_call.1} parent=147 // pred_check_branch
              %822 = sbr.rel (0) target = $region152
            $region151: #{tpu_custom_call.1} parent=147 // pred_region
              // Predicated region
              $region171: #{tpu_custom_call.1} parent=151 // pred_check
                _
              $region172: #{tpu_custom_call.1} parent=151 // pred_check_branch
                %878 = sbr.rel (0) target = $region174
              $region173: #{tpu_custom_call.1} parent=151 // pred_region
                %s879 = sshrl.u32 %s813, 2
                // While loop
                $region175: #{tpu_custom_call.1} parent=173 // loop_pre_header
                  _
                $region176: #{tpu_custom_call.1} parent=173 // loop_header
                  %s881 = sphi 0, %s883
                  %p882 = scmp.ge.s32.totalorder %s881, %s879
                  %s886 = sphi 0, %s899
                  %s887 = sphi %s556, %s902
                  %s888 = sphi %s817, %s903
                $region177: #{tpu_custom_call.1} parent=173 // loop_header_branch
                  %885 = sbr.rel (%p882) target = $region181
                $region178: #{tpu_custom_call.1} parent=173 // loop_body
                  %v889 = vld [vmem:[%s887] sm:$0xff]
                  %890 = vst [vmem:[%s888] sm:$0xff] %v889
                  %v891 = vld [vmem:[%s887 + $0x8] sm:$0xff]
                  %892 = vst [vmem:[%s888 + $0x8] sm:$0xff] %v891
                  %v893 = vld [vmem:[%s887 + $0x10] sm:$0xff]
                  %894 = vst [vmem:[%s888 + $0x10] sm:$0xff] %v893
                  %v895 = vld [vmem:[%s887 + $0x18] sm:$0xff]
                  %896 = vst [vmem:[%s888 + $0x18] sm:$0xff] %v895
                  %s897 = sadd.s32 1, %s886
                  %p898 = scmp.ge.s32.totalorder %s897, %s879
                  %s899 = scalar_select %p898, 0, %s897
                  %s900 = smul.u32 %s899, 32
                  %s901 = smul.u32 %s899, 32
                  %s902 = scalar_lea.vmem %s556, %s900 [#allocation4]
                  %s903 = scalar_lea.vmem %s817, %s901
                $region179: #{tpu_custom_call.1} parent=173 // loop_footer
                  %s883 = sadd.s32 %s881, 1
                $region180: #{tpu_custom_call.1} parent=173 // loop_footer_branch
                  %880 = sbr.rel target = $region176
                $region181: #{tpu_custom_call.1} parent=173 // loop_exit
                  _
                %s904 = sshrl.u32 %s813, 2
                %s905 = sand.u32 %s813, 3
                %s906 = smul.u32 %s904, 4
                %s907 = smul.u32 8, %s906
                %s908 = scalar_lea.vmem %s556, %s907 [#allocation4]
                %s909 = smul.u32 8, %s906
                %s910 = scalar_lea.vmem %s817, %s909
                // While loop
                $region182: #{tpu_custom_call.1} parent=173 // loop_pre_header
                  _
                $region183: #{tpu_custom_call.1} parent=173 // loop_header
                  %s912 = sphi 0, %s914
                  %p913 = scmp.ge.s32.totalorder %s912, %s905
                  %s917 = sphi 0, %s924
                  %s918 = sphi %s908, %s927
                  %s919 = sphi %s910, %s928
                $region184: #{tpu_custom_call.1} parent=173 // loop_header_branch
                  %916 = sbr.rel (%p913) target = $region188
                $region185: #{tpu_custom_call.1} parent=173 // loop_body
                  %v920 = vld [vmem:[%s918] sm:$0xff]
                  %921 = vst [vmem:[%s919] sm:$0xff] %v920
                  %s922 = sadd.s32 1, %s917
                  %p923 = scmp.ge.s32.totalorder %s922, %s905
                  %s924 = scalar_select %p923, 0, %s922
                  %s925 = smul.u32 %s924, 8
                  %s926 = smul.u32 %s924, 8
                  %s927 = scalar_lea.vmem %s908, %s925 [#allocation4]
                  %s928 = scalar_lea.vmem %s910, %s926
                $region186: #{tpu_custom_call.1} parent=173 // loop_footer
                  %s914 = sadd.s32 %s912, 1
                $region187: #{tpu_custom_call.1} parent=173 // loop_footer_branch
                  %911 = sbr.rel target = $region183
                $region188: #{tpu_custom_call.1} parent=173 // loop_exit
                  _
              $region174: #{tpu_custom_call.1} parent=151 // pred_fallthru
                _
              // Predicated region
              $region189: #{tpu_custom_call.1} parent=151 // pred_check
                _
              $region190: #{tpu_custom_call.1} parent=151 // pred_check_branch
                %930 = sbr.rel target = $region192
              $region191: #{tpu_custom_call.1} parent=151 // pred_region
                _
              $region192: #{tpu_custom_call.1} parent=151 // pred_fallthru
                _
            $region152: #{tpu_custom_call.1} parent=147 // pred_fallthru
              _
            // Predicated region
            $region153: #{tpu_custom_call.1} parent=147 // pred_check
              _
            $region154: #{tpu_custom_call.1} parent=147 // pred_check_branch
              %824 = sbr.rel target = $region156
            $region155: #{tpu_custom_call.1} parent=147 // pred_region
              %s826 = ssub.s32 256, 1
              %s827 = sshrl.u32 %s813, 2
              // While loop
              $region157: #{tpu_custom_call.1} parent=155 // loop_pre_header
                _
              $region158: #{tpu_custom_call.1} parent=155 // loop_header
                %s829 = sphi 0, %s831
                %p830 = scmp.ge.s32.totalorder %s829, %s827
                %s834 = sphi 0, %s847
                %s835 = sphi %s556, %s850
                %s836 = sphi %s817, %s851
              $region159: #{tpu_custom_call.1} parent=155 // loop_header_branch
                %833 = sbr.rel (%p830) target = $region163
              $region160: #{tpu_custom_call.1} parent=155 // loop_body
                %v837 = vld [vmem:[%s835] sm:%s826]
                %838 = vst [vmem:[%s836] sm:%s826] %v837
                %v839 = vld [vmem:[%s835 + $0x8] sm:%s826]
                %840 = vst [vmem:[%s836 + $0x8] sm:%s826] %v839
                %v841 = vld [vmem:[%s835 + $0x10] sm:%s826]
                %842 = vst [vmem:[%s836 + $0x10] sm:%s826] %v841
                %v843 = vld [vmem:[%s835 + $0x18] sm:%s826]
                %844 = vst [vmem:[%s836 + $0x18] sm:%s826] %v843
                %s845 = sadd.s32 1, %s834
                %p846 = scmp.ge.s32.totalorder %s845, %s827
                %s847 = scalar_select %p846, 0, %s845
                %s848 = smul.u32 %s847, 32
                %s849 = smul.u32 %s847, 32
                %s850 = scalar_lea.vmem %s556, %s848 [#allocation4]
                %s851 = scalar_lea.vmem %s817, %s849
              $region161: #{tpu_custom_call.1} parent=155 // loop_footer
                %s831 = sadd.s32 %s829, 1
              $region162: #{tpu_custom_call.1} parent=155 // loop_footer_branch
                %828 = sbr.rel target = $region158
              $region163: #{tpu_custom_call.1} parent=155 // loop_exit
                _
              %s852 = sshrl.u32 %s813, 2
              %s853 = sand.u32 %s813, 3
              %s854 = smul.u32 %s852, 4
              %s855 = smul.u32 8, %s854
              %s856 = scalar_lea.vmem %s556, %s855 [#allocation4]
              %s857 = smul.u32 8, %s854
              %s858 = scalar_lea.vmem %s817, %s857
              // While loop
              $region164: #{tpu_custom_call.1} parent=155 // loop_pre_header
                _
              $region165: #{tpu_custom_call.1} parent=155 // loop_header
                %s860 = sphi 0, %s862
                %p861 = scmp.ge.s32.totalorder %s860, %s853
                %s865 = sphi 0, %s872
                %s866 = sphi %s856, %s875
                %s867 = sphi %s858, %s876
              $region166: #{tpu_custom_call.1} parent=155 // loop_header_branch
                %864 = sbr.rel (%p861) target = $region170
              $region167: #{tpu_custom_call.1} parent=155 // loop_body
                %v868 = vld [vmem:[%s866] sm:%s826]
                %869 = vst [vmem:[%s867] sm:%s826] %v868
                %s870 = sadd.s32 1, %s865
                %p871 = scmp.ge.s32.totalorder %s870, %s853
                %s872 = scalar_select %p871, 0, %s870
                %s873 = smul.u32 %s872, 8
                %s874 = smul.u32 %s872, 8
                %s875 = scalar_lea.vmem %s856, %s873 [#allocation4]
                %s876 = scalar_lea.vmem %s858, %s874
              $region168: #{tpu_custom_call.1} parent=155 // loop_footer
                %s862 = sadd.s32 %s860, 1
              $region169: #{tpu_custom_call.1} parent=155 // loop_footer_branch
                %859 = sbr.rel target = $region165
              $region170: #{tpu_custom_call.1} parent=155 // loop_exit
                _
            $region156: #{tpu_custom_call.1} parent=147 // pred_fallthru
              _
          $region148: #{tpu_custom_call.1} parent=143 // pred_fallthru
            _
          %931 = vnop
        $region144: #{tpu_custom_call.1} parent=35 // pred_fallthru
          _
      $region36: #{tpu_custom_call.1} parent=5 // pred_fallthru
        _
      %p932 = scmp.le.s32.totalorder 2, %s13
      // Predicated region
      $region193: #{tpu_custom_call.1} parent=5 // pred_check
        %p933 = pneg %p932
      $region194: #{tpu_custom_call.1} parent=5 // pred_check_branch
        %935 = sbr.rel (%p933) target = $region196
      $region195: #{tpu_custom_call.1} parent=5 // pred_region
        %s936 = ssub.s32 %s13, 2
        // Predicated region
        $region197: #{tpu_custom_call.1} parent=195 // pred_check
          %p937 = pneg %p136
        $region198: #{tpu_custom_call.1} parent=195 // pred_check_branch
          %939 = sbr.rel (%p937) target = $region200
        $region199: #{tpu_custom_call.1} parent=195 // pred_region
          %s940 = sand.u32 %s121, 1
          %s941 = sand.u32 %s121, 1
          %s942 = smul.addr %s941, 32
          %s943 = scalar_lea.vmem [#allocation2], %s942
        $region200: #{tpu_custom_call.1} parent=195 // pred_fallthru
          _
        // Predicated region
        $region201: #{tpu_custom_call.1} parent=195 // pred_check
          %p944 = pneg %p162
        $region202: #{tpu_custom_call.1} parent=195 // pred_check_branch
          %946 = sbr.rel (%p944) target = $region204
        $region203: #{tpu_custom_call.1} parent=195 // pred_region
          %s947 = sand.u32 %s147, 1
          %s948 = sand.u32 %s147, 1
          %s949 = smul.addr %s948, 32
          %s950 = scalar_lea.vmem [#allocation3], %s949
        $region204: #{tpu_custom_call.1} parent=195 // pred_fallthru
          _
        // Predicated region
        $region205: #{tpu_custom_call.1} parent=195 // pred_check
          %p951 = pneg %p188
        $region206: #{tpu_custom_call.1} parent=195 // pred_check_branch
          %953 = sbr.rel (%p951) target = $region208
        $region207: #{tpu_custom_call.1} parent=195 // pred_region
          %s954 = sand.u32 %s173, 1
          %s955 = sand.u32 %s173, 1
          %s956 = smul.addr %s955, 32
          %s957 = scalar_lea.vmem [#allocation4], %s956
        $region208: #{tpu_custom_call.1} parent=195 // pred_fallthru
          _
      $region196: #{tpu_custom_call.1} parent=5 // pred_fallthru
        _
    $region6: #{tpu_custom_call.1} parent=1 // loop_footer
      %s17 = sadd.s32 1, %s13
    $region7: #{tpu_custom_call.1} parent=1 // loop_footer_branch
      %12 = sbr.rel target = $region3
    $region8: #{tpu_custom_call.1} parent=1 // loop_exit
      _

</llo_original>
